<compile_context>
chip_gen: v6e
topology: v6e:2x2x1
jax: 0.10.0
libtpu: 0.0.40
codegen_flags: <defaults>
</compile_context>

<pallas_src>
import functools

import jax
import jax.numpy as jnp
from jax import lax
from jax.experimental import pallas as pl
from jax.experimental.pallas import tpu as pltpu


_LANE = 128
_MAX_MN_UNITS = 4      # up to 512-wide M/N tiles
_MAX_K_UNITS = 4       # up to 512-deep K tiles
_SMALL_DIM = 256       # per-batch matmul counts as "tiny" below this
_MAX_BATCH_FOLD = 8    # max batches folded into one grid step on the tiny path

_DN_NN = (((1,), (0,)), ((), ()))   # a[m,k] . b[k,n]
_DN_NT = (((1,), (1,)), ((), ()))   # a[m,k] . b[n,k]   (== a @ b.T)

_ILLEGAL = "the dimensions of the two matrix for multiply is illegal"


def _cdiv(a, b):
    return -(-a // b)


def _plan_dim(dim, max_units):
    """Plan one matmul dimension -> (tile, padded_extent, n_blocks).

    If the dim fits in a single tile we use the full (possibly unaligned)
    extent as the block dim (exempt from the (8,128) rule), so no padding is
    needed.  Otherwise the tile is a 128-multiple dividing the 128-rounded
    extent (minimal padding).
    """
    units = _cdiv(dim, _LANE)
    if units <= max_units:
        return dim, dim, 1
    t_units = max(d for d in range(1, max_units + 1) if units % d == 0)
    return _LANE * t_units, _LANE * units, units // t_units


def _pad3(x, rows_p, cols_p):
    """Zero-pad the trailing two dims of [B, r, c] up to (rows_p, cols_p)."""
    b, r, c = x.shape
    if r == rows_p and c == cols_p:
        return x
    return jnp.pad(x, ((0, 0), (0, rows_p - r), (0, cols_p - c)))


# -----------------------------------------------------------------------------
# Kernels
# -----------------------------------------------------------------------------

def _single_k_kernel(dnums):
    """K fits in one block: no accumulator, no K grid axis."""
    def kernel(a_ref, b_ref, o_ref):
        o_ref[...] = lax.dot_general(
            a_ref[...], b_ref[...], dimension_numbers=dnums,
            preferred_element_type=jnp.float32).astype(o_ref.dtype)
    return kernel


def _multi_k_inplace_kernel(dnums):
    """f32 output: accumulate directly into the VMEM-resident output block."""
    def kernel(a_ref, b_ref, o_ref):
        k = pl.program_id(3)
        p = lax.dot_general(a_ref[...], b_ref[...], dimension_numbers=dnums,
                            preferred_element_type=jnp.float32)

        @pl.when(k == 0)
        def _():
            o_ref[...] = p

        @pl.when(k != 0)
        def _():
            o_ref[...] += p
    return kernel


def _multi_k_scratch_kernel(dnums):
    """Non-f32 output: f32 accumulator scratch, flushed at the last K step."""
    def kernel(a_ref, b_ref, o_ref, acc_ref):
        k = pl.program_id(3)

        @pl.when(k == 0)
        def _():
            acc_ref[...] = jnp.zeros_like(acc_ref)

        acc_ref[...] += lax.dot_general(a_ref[...], b_ref[...],
                                        dimension_numbers=dnums,
                                        preferred_element_type=jnp.float32)

        @pl.when(k == pl.num_programs(3) - 1)
        def _():
            o_ref[...] = acc_ref[...].astype(o_ref.dtype)
    return kernel


def _batched_kernel(einsum_str):
    """Tiny per-batch matmuls: several batches per grid step via batched einsum."""
    def kernel(a_ref, b_ref, o_ref):
        o_ref[...] = jnp.einsum(
            einsum_str, a_ref[...], b_ref[...],
            preferred_element_type=jnp.float32).astype(o_ref.dtype)
    return kernel


# -----------------------------------------------------------------------------
# Wrapper
# -----------------------------------------------------------------------------

@functools.partial(jax.jit, static_argnames=("operation", "compute_dtype"))
def matrix_multiply(string, string_len, string2, operation="common",
                    compute_dtype=None):
    """Pallas implementation of MatrixMultiply.forward.

    Args:
      string:     [batch, seq_len, dim]
      string_len: [batch]
      string2:    second matrix (shape depends on `operation`)
      operation:  'common' | 'seq_based' | 'dim_based'
      compute_dtype: optional operand dtype for the MXU (e.g. jnp.bfloat16);
        accumulation stays f32.  None keeps the input dtype (exact semantics).

    Returns:
      (result, string_len)  -- same convention as the PyTorch module.
    """
    B, S, D = string.shape
    B2, R2, C2 = string2.shape
    if B != B2:
        raise Exception("batch dims must match")

    out_dtype = string.dtype

    if operation == "common":
        if D != R2:
            raise Exception(_ILLEGAL)
        M, N, K = S, C2, D
        a, b = string, string2                      # a [B,M,K], b [B,K,N]
        nt = False
    elif operation == "seq_based":
        if S != R2:
            raise Exception(_ILLEGAL)
        M, N, K = D, C2, S
        a = jnp.transpose(string, (0, 2, 1))        # [B,D,S] == [B,M,K]
        b = string2                                 # [B,S,N] == [B,K,N]
        nt = False
    elif operation == "dim_based":
        if D != C2:
            raise Exception(_ILLEGAL)
        M, N, K = S, R2, D
        a, b = string, string2                      # a [B,M,K], b [B,N,K]
        nt = True
    else:
        raise ValueError(f"unknown operation: {operation}")

    if compute_dtype is not None:
        a = a.astype(compute_dtype)
        b = b.astype(compute_dtype)

    in_itemsize = jnp.dtype(a.dtype).itemsize
    out_itemsize = jnp.dtype(out_dtype).itemsize

    # ------------------------------------------------------------------
    # Tiny-shape fast path: fold several batches into one grid step.
    # ------------------------------------------------------------------
    if B > 1 and max(M, N, K) <= _SMALL_DIM:
        nb = max(d for d in range(1, min(B, _MAX_BATCH_FOLD) + 1) if B % d == 0)
        einsum_str = "bmk,bnk->bmn" if nt else "bmk,bkn->bmn"
        b_tail = (N, K) if nt else (K, N)

        a_spec = pl.BlockSpec((nb, M, K), lambda i: (i, 0, 0))
        b_spec = pl.BlockSpec((nb,) + b_tail, lambda i: (i, 0, 0))
        out_spec = pl.BlockSpec((nb, M, N), lambda i: (i, 0, 0))

        need = (2 * nb * in_itemsize * (M * K + K * N)
                + 2 * nb * out_itemsize * M * N)
        vmem_limit = int(min(48 << 20, max(32 << 20, 2 * need)))
        cost = pl.CostEstimate(
            flops=2 * B * M * N * K,
            transcendentals=0,
            bytes_accessed=in_itemsize * B * (M * K + K * N)
            + out_itemsize * B * M * N)

        out = pl.pallas_call(
            _batched_kernel(einsum_str),
            out_shape=jax.ShapeDtypeStruct((B, M, N), out_dtype),
            grid_spec=pltpu.PrefetchScalarGridSpec(
                num_scalar_prefetch=0,
                grid=(B // nb,),
                in_specs=[a_spec, b_spec],
                out_specs=out_spec),
            compiler_params=pltpu.CompilerParams(
                dimension_semantics=("parallel",),
                vmem_limit_bytes=vmem_limit),
            cost_estimate=cost,
        )(a, b)
        return out, string_len

    # ------------------------------------------------------------------
    # General tiled path.
    # ------------------------------------------------------------------
    tm, Mp, gm = _plan_dim(M, _MAX_MN_UNITS)
    tn, Np, gn = _plan_dim(N, _MAX_MN_UNITS)
    tk, Kp, nk = _plan_dim(K, _MAX_K_UNITS)

    # v7x has 2 TensorCores; the grid is only sharded along "parallel" axes.
    # If batch is 1 and both M/N collapsed to a single block, split one of
    # them into two blocks so both cores get work.
    if B == 1 and gm == 1 and gn == 1:
        if _cdiv(M, _LANE) >= 2:
            t = _cdiv(_cdiv(M, _LANE), 2)
            tm, Mp, gm = _LANE * t, 2 * _LANE * t, 2
        elif _cdiv(N, _LANE) >= 2:
            t = _cdiv(_cdiv(N, _LANE), 2)
            tn, Np, gn = _LANE * t, 2 * _LANE * t, 2

    # Zero-pad only the dims that are actually tiled (padding along K adds
    # zeros to the sums; padded M/N rows/cols are sliced off afterwards).
    # TODO(synk): replace padding of large unaligned M/N with masked edge-tile
    # stores to save the extra HBM passes on memory-bound shapes.
    a = _pad3(a, Mp, Kp)
    b = _pad3(b, Np, Kp) if nt else _pad3(b, Kp, Np)

    dnums = _DN_NT if nt else _DN_NN
    acc_in_out = jnp.dtype(out_dtype) == jnp.dtype(jnp.float32)

    if nk == 1:
        grid = (B, gm, gn)
        a_spec = pl.BlockSpec((pl.Squeezed(), tm, tk), lambda bb, i, j: (bb, i, 0))
        if nt:
            b_spec = pl.BlockSpec((pl.Squeezed(), tn, tk), lambda bb, i, j: (bb, j, 0))
        else:
            b_spec = pl.BlockSpec((pl.Squeezed(), tk, tn), lambda bb, i, j: (bb, 0, j))
        out_spec = pl.BlockSpec((pl.Squeezed(), tm, tn), lambda bb, i, j: (bb, i, j))
        dim_sem = ("parallel", "parallel", "parallel")
        scratch = []
        kernel = _single_k_kernel(dnums)
    else:
        grid = (B, gm, gn, nk)
        a_spec = pl.BlockSpec((pl.Squeezed(), tm, tk), lambda bb, i, j, k: (bb, i, k))
        if nt:
            b_spec = pl.BlockSpec((pl.Squeezed(), tn, tk), lambda bb, i, j, k: (bb, j, k))
        else:
            b_spec = pl.BlockSpec((pl.Squeezed(), tk, tn), lambda bb, i, j, k: (bb, k, j))
        out_spec = pl.BlockSpec((pl.Squeezed(), tm, tn), lambda bb, i, j, k: (bb, i, j))
        dim_sem = ("parallel", "parallel", "parallel", "arbitrary")
        if acc_in_out:
            scratch = []
            kernel = _multi_k_inplace_kernel(dnums)
        else:
            scratch = [pltpu.VMEM((tm, tn), jnp.float32)]
            kernel = _multi_k_scratch_kernel(dnums)

    need = (2 * in_itemsize * (tm * tk + tk * tn)
            + 2 * out_itemsize * tm * tn
            + (4 * tm * tn if scratch else 0))
    vmem_limit = int(min(48 << 20, max(32 << 20, 2 * need)))

    cost = pl.CostEstimate(
        flops=2 * B * Mp * Np * Kp,
        transcendentals=0,
        bytes_accessed=in_itemsize * B * (Mp * Kp * gn + Kp * Np * gm)
        + out_itemsize * B * Mp * Np)

    out = pl.pallas_call(
        kernel,
        out_shape=jax.ShapeDtypeStruct((B, Mp, Np), out_dtype),
        grid_spec=pltpu.PrefetchScalarGridSpec(
            num_scalar_prefetch=0,
            grid=grid,
            in_specs=[a_spec, b_spec],
            out_specs=out_spec,
            scratch_shapes=scratch),
        compiler_params=pltpu.CompilerParams(
            dimension_semantics=dim_sem,
            vmem_limit_bytes=vmem_limit),
        cost_estimate=cost,
    )(a, b)

    if Mp != M or Np != N:
        out = out[:, :M, :N]

    # The length MatrixMultiply returns is the length of the first input.
    return out, string_len


# -----------------------------------------------------------------------------
# Self-test
# -----------------------------------------------------------------------------

def _check(out, ref, rtol=2e-2, atol=2e-2):
    assert out.shape == ref.shape, (out.shape, ref.shape)
    assert jnp.allclose(out, ref, rtol=rtol, atol=atol), (
        float(jnp.max(jnp.abs(out - ref))))


if __name__ == "__main__":
    key = jax.random.PRNGKey(0)
    k1, k2, k3, k4, k5, k6, k7, k8 = jax.random.split(key, 8)
    hi = jax.lax.Precision.HIGHEST

    # ---- small shapes consistent with the module (tiny-batched path) ----
    batch, seq, dim, n_out, seq2 = 2, 8, 32, 16, 10
    string = jax.random.normal(k1, (batch, seq, dim), dtype=jnp.float32)
    string_len = jnp.full((batch,), seq, dtype=jnp.int32)

    # 'common': string2 [batch, dim, n_out]
    s2_common = jax.random.normal(k2, (batch, dim, n_out), dtype=jnp.float32)
    out_c, len_c = matrix_multiply(string, string_len, s2_common, operation="common")
    _check(out_c, jnp.matmul(string, s2_common, precision=hi))
    assert jnp.array_equal(len_c, string_len)

    # 'seq_based': string2 [batch, seq, n_out]
    s2_seq = jax.random.normal(k3, (batch, seq, n_out), dtype=jnp.float32)
    out_s, _ = matrix_multiply(string, string_len, s2_seq, operation="seq_based")
    _check(out_s, jnp.matmul(jnp.transpose(string, (0, 2, 1)), s2_seq, precision=hi))

    # 'dim_based': string2 [batch, seq2, dim]
    s2_dim = jax.random.normal(k4, (batch, seq2, dim), dtype=jnp.float32)
    out_d, _ = matrix_multiply(string, string_len, s2_dim, operation="dim_based")
    _check(out_d, jnp.matmul(string, jnp.transpose(s2_dim, (0, 2, 1)), precision=hi))

    # ---- general tiled path, single K step (also exercises B==1 M-split) ----
    x1 = jax.random.normal(k5, (1, 384, 96), dtype=jnp.float32)
    w1 = jax.random.normal(k6, (1, 96, 256), dtype=jnp.float32)
    l1 = jnp.full((1,), 384, dtype=jnp.int32)
    out1, _ = matrix_multiply(x1, l1, w1, operation="common")
    _check(out1, jnp.matmul(x1, w1, precision=hi))

    # ---- general tiled path, multi K step (in-place f32 accumulation) ----
    x2 = jax.random.normal(k7, (1, 128, 640), dtype=jnp.float32)
    w2 = jax.random.normal(k8, (1, 640, 128), dtype=jnp.float32)
    l2 = jnp.full((1,), 128, dtype=jnp.int32)
    out2, _ = matrix_multiply(x2, l2, w2, operation="common")
    _check(out2, jnp.matmul(x2, w2, precision=hi))

    jax.block_until_ready((out_c, out_s, out_d, out1, out2))
    print("KERNEL_OK")
</pallas_src>

<mosaic_0001>
module attributes {stable_mosaic.version = 11 : i64} {
  func.func @kernel(%arg0: i32, %arg1: memref<2x8x32xf32, #tpu.memory_space<vmem>>, %arg2: memref<2x32x16xf32, #tpu.memory_space<vmem>>, %arg3: memref<2x8x16xf32, #tpu.memory_space<vmem>>) attributes {dimension_semantics = [#tpu.dimension_semantics<parallel>], iteration_bounds = array<i64: 1>, scalar_prefetch = 0 : i64, scratch_operands = 0 : i64, tpu.core_type = #tpu.core_type<tc>, window_params = [{transform_indices = @transform_0, window_bounds = array<i64: 2, 8, 32>}, {transform_indices = @transform_1, window_bounds = array<i64: 2, 32, 16>}, {transform_indices = @transform_2, window_bounds = array<i64: 2, 8, 16>}]} {
    %c0 = arith.constant 0 : index
    %c0_0 = arith.constant 0 : index
    %c0_1 = arith.constant 0 : index
    %0 = vector.load %arg1[%c0, %c0_0, %c0_1] : memref<2x8x32xf32, #tpu.memory_space<vmem>>, vector<2x8x32xf32>
    %c0_2 = arith.constant 0 : index
    %c0_3 = arith.constant 0 : index
    %c0_4 = arith.constant 0 : index
    %1 = vector.load %arg2[%c0_2, %c0_3, %c0_4] : memref<2x32x16xf32, #tpu.memory_space<vmem>>, vector<2x32x16xf32>
    "tpu.trace_start"() <{level = 10 : i32, message = "bmk,bkn->bmn"}> : () -> ()
    %cst = arith.constant dense<0.000000e+00> : vector<2x8x16xf32>
    %2 = tpu.matmul %0, %1, %cst {dimension_numbers = #tpu.dot_dimension_numbers<[2], [1], [1], [2], [0, 0, 0, 1, 1, 2], [0], [0]>} : vector<2x8x32xf32>, vector<2x32x16xf32>, vector<2x8x16xf32> -> vector<2x8x16xf32>
    "tpu.trace_stop"() : () -> ()
    %c0_5 = arith.constant 0 : index
    %c0_6 = arith.constant 0 : index
    %c0_7 = arith.constant 0 : index
    %3 = vector.load %arg3[%c0_5, %c0_6, %c0_7] : memref<2x8x16xf32, #tpu.memory_space<vmem>>, vector<2x8x16xf32>
    tpu.vector_store %arg3[%c0_5, %c0_6, %c0_7], %2 {strides = array<i32>} : memref<2x8x16xf32, #tpu.memory_space<vmem>>, vector<2x8x16xf32>,
    return
  }
  func.func @transform_0(%arg0: i32) -> (i32, i32, i32) {
    %c0_i32 = arith.constant 0 : i32
    %c0_i32_0 = arith.constant 0 : i32
    %c0_i32_1 = arith.constant 0 : i32
    return %arg0, %c0_i32, %c0_i32_0 : i32, i32, i32
  }
  func.func @transform_1(%arg0: i32) -> (i32, i32, i32) {
    %c0_i32 = arith.constant 0 : i32
    %c0_i32_0 = arith.constant 0 : i32
    %c0_i32_1 = arith.constant 0 : i32
    return %arg0, %c0_i32, %c0_i32_0 : i32, i32, i32
  }
  func.func @transform_2(%arg0: i32) -> (i32, i32, i32) {
    %c0_i32 = arith.constant 0 : i32
    %c0_i32_0 = arith.constant 0 : i32
    %c0_i32_1 = arith.constant 0 : i32
    return %arg0, %c0_i32, %c0_i32_0 : i32, i32, i32
  }
}

</mosaic_0001>

<llo_original>
// kernel: matrix_multiply.1
$region0: #{matrix_multiply.1}
  #allocation0 [shape = 'u32[]', space=smem, size = 0x4, offset = 0x4, fixed_abs, tag = 'smem constant byte address 0x4 - core index']
  #allocation1 [shape = 'u32[144,128]{1,0:T(1,128)}', space=vmem, size = 0x12000, scoped, tag = 'internal scratch']
  %s0 = inlined_call_operand.vmem [shape: f32[2,8,32], index: 0, kind: input, shape index: {}]
  %s1 = inlined_call_operand.vmem [shape: f32[2,32,16], index: 1, kind: input, shape index: {}]
  %s2 = inlined_call_operand.hbm [shape: f32[2,8,16], index: 2, kind: output, shape index: {}]
  %s3 = sld [smem:[#allocation0]]
  $region18: #{matrix_multiply.1} parent=0
    _
  %s5 = ssub.s32 1, %s3
  %s6 = scalar_select 0, %s5, %s3
  $region1: #{matrix_multiply.1} parent=0
    #allocation2 [shape = 'u8[8192]{0}', space=vmem, size = 0x2000, scoped, tag = 'output window, operand 0, single buffered']
    #allocation3 [shape = 's32[1]{0}', space=sflag, size = 0x4, scoped, tag = 'scoped memory for matrix_multiply.1']
    %7 = vsyncpa [#allocation3], 0
    // Predicated region
    $region2: #{matrix_multiply.1} parent=1 // pred_check
      _
    $region3: #{matrix_multiply.1} parent=1 // pred_check_branch
      %9 = sbr.rel (0) target = $region5
    $region4: #{matrix_multiply.1} parent=1 // pred_region
      _
    $region5: #{matrix_multiply.1} parent=1 // pred_fallthru
      _
    // Predicated region
    $region6: #{matrix_multiply.1} parent=1 // pred_check
      _
    $region7: #{matrix_multiply.1} parent=1 // pred_check_branch
      %11 = sbr.rel (0) target = $region9
    $region8: #{matrix_multiply.1} parent=1 // pred_region
      _
    $region9: #{matrix_multiply.1} parent=1 // pred_fallthru
      _
    %v12 = vld [vmem:[%s0] sm:$0xff]
    %v13 = vld [vmem:[%s0 + $0x8] sm:$0xff]
    %v14 = vld [vmem:[%s1] sm:$0xff]
    %v15 = vld [vmem:[%s1 + $0x8] sm:$0xff]
    %v16 = vld [vmem:[%s1 + $0x10] sm:$0xff]
    %v17 = vld [vmem:[%s1 + $0x18] sm:$0xff]
    %v18 = vld [vmem:[%s1 + $0x20] sm:$0xff]
    %v19 = vld [vmem:[%s1 + $0x28] sm:$0xff]
    %v20 = vld [vmem:[%s1 + $0x30] sm:$0xff]
    %v21 = vld [vmem:[%s1 + $0x38] sm:$0xff]
    %vm22 = vcmask 261120
    %v24 = vsel %vm22, %v12, 0
    %26 = vmatprep.subr.mxu0 0.0
    %27 = vmatpush1.msra.mxu0 0.0
    %28 = vmatprep.subr.mxu0 0.0
    %29 = vmatpush1.msra.mxu0 0.0
    %30 = vmatprep.subr.mxu0 0.0
    %31 = vmatpush1.msra.mxu0 0.0
    %32 = vmatprep.subr.mxu0 0.0
    %33 = vmatpush1.msra.mxu0 0.0
    %34 = vmatprep.subr.mxu0 0.0
    %35 = vmatpush1.msra.mxu0 0.0
    %36 = vmatprep.subr.mxu0 0.0
    %37 = vmatpush1.msra.mxu0 0.0
    %38 = vmatprep.subr.mxu0 0.0
    %39 = vmatpush1.msra.mxu0 0.0
    %40 = vmatprep.subr.mxu0 0.0
    %41 = vmatpush1.msra.mxu0 0.0
    %42 = vmatprep.subr.mxu0 0.0
    %43 = vmatpush1.msra.mxu0 0.0
    %44 = vmatprep.subr.mxu0 0.0
    %45 = vmatpush1.msra.mxu0 0.0
    %46 = vmatprep.subr.mxu0 0.0
    %47 = vmatpush1.msra.mxu0 0.0
    %48 = vmatprep.subr.mxu0 0.0
    %49 = vmatpush1.msra.mxu0 0.0
    %50 = vmatprep.subr.mxu0 0.0
    %51 = vmatpush1.msra.mxu0 %v17
    %52 = vmatprep.subr.mxu0 0.0
    %53 = vmatpush1.msra.mxu0 %v16
    %54 = vmatprep.subr.mxu0 0.0
    %55 = vmatpush1.msra.mxu0 %v15
    %56 = vmatprep.subr.mxu0 0.0
    %57 = vmatpush1.msra.mxu0 %v14
    %58 = vmatprep.subr.mxu0 0.0
    %59 = vmatpush2.msra.mxu0 0.0
    %60 = vmatprep.subr.mxu0 0.0
    %61 = vmatpush2.msra.mxu0 0.0
    %62 = vmatprep.subr.mxu0 0.0
    %63 = vmatpush2.msra.mxu0 0.0
    %64 = vmatprep.subr.mxu0 0.0
    %65 = vmatpush2.msra.mxu0 0.0
    %66 = vmatprep.subr.mxu0 0.0
    %67 = vmatpush2.msra.mxu0 0.0
    %68 = vmatprep.subr.mxu0 0.0
    %69 = vmatpush2.msra.mxu0 0.0
    %70 = vmatprep.subr.mxu0 0.0
    %71 = vmatpush2.msra.mxu0 0.0
    %72 = vmatprep.subr.mxu0 0.0
    %73 = vmatpush2.msra.mxu0 0.0
    %74 = vmatprep.subr.mxu0 0.0
    %75 = vmatpush2.msra.mxu0 0.0
    %76 = vmatprep.subr.mxu0 0.0
    %77 = vmatpush2.msra.mxu0 0.0
    %78 = vmatprep.subr.mxu0 0.0
    %79 = vmatpush2.msra.mxu0 0.0
    %80 = vmatprep.subr.mxu0 0.0
    %81 = vmatpush2.msra.mxu0 0.0
    %82 = vmatprep.subr.mxu0 0.0
    %83 = vmatpush2.msra.mxu0 0.0
    %84 = vmatprep.subr.mxu0 0.0
    %85 = vmatpush2.msra.mxu0 0.0
    %86 = vmatprep.subr.mxu0 0.0
    %87 = vmatpush2.msra.mxu0 0.0
    %88 = vmatprep.subr.mxu0 0.0
    %89 = vmatpush2.msra.mxu0 0.0
    %90 = vmatprep.mubr.f32.mxu0 0.0
    %91 = vmatmul.mubr.f32.gmra.mxu0 %v24
    %v92 = vpop.f32.mrf.mxu0
    %v93 = vadd.f32 0.0, %v92
    %v94 = vpop.f32.mrf.mxu0
    %95 = vdwg.mxu0
    %v97 = vsel %vm22, %v13, 0
    %99 = vmatprep.subr.mxu0 0.0
    %100 = vmatpush1.msra.mxu0 0.0
    %101 = vmatprep.subr.mxu0 0.0
    %102 = vmatpush1.msra.mxu0 0.0
    %103 = vmatprep.subr.mxu0 0.0
    %104 = vmatpush1.msra.mxu0 0.0
    %105 = vmatprep.subr.mxu0 0.0
    %106 = vmatpush1.msra.mxu0 0.0
    %107 = vmatprep.subr.mxu0 0.0
    %108 = vmatpush1.msra.mxu0 0.0
    %109 = vmatprep.subr.mxu0 0.0
    %110 = vmatpush1.msra.mxu0 0.0
    %111 = vmatprep.subr.mxu0 0.0
    %112 = vmatpush1.msra.mxu0 0.0
    %113 = vmatprep.subr.mxu0 0.0
    %114 = vmatpush1.msra.mxu0 0.0
    %115 = vmatprep.subr.mxu0 0.0
    %116 = vmatpush1.msra.mxu0 0.0
    %117 = vmatprep.subr.mxu0 0.0
    %118 = vmatpush1.msra.mxu0 0.0
    %119 = vmatprep.subr.mxu0 0.0
    %120 = vmatpush1.msra.mxu0 0.0
    %121 = vmatprep.subr.mxu0 0.0
    %122 = vmatpush1.msra.mxu0 0.0
    %123 = vmatprep.subr.mxu0 0.0
    %124 = vmatpush1.msra.mxu0 %v21
    %125 = vmatprep.subr.mxu0 0.0
    %126 = vmatpush1.msra.mxu0 %v20
    %127 = vmatprep.subr.mxu0 0.0
    %128 = vmatpush1.msra.mxu0 %v19
    %129 = vmatprep.subr.mxu0 0.0
    %130 = vmatpush1.msra.mxu0 %v18
    %131 = vmatprep.subr.mxu0 0.0
    %132 = vmatpush2.msra.mxu0 0.0
    %133 = vmatprep.subr.mxu0 0.0
    %134 = vmatpush2.msra.mxu0 0.0
    %135 = vmatprep.subr.mxu0 0.0
    %136 = vmatpush2.msra.mxu0 0.0
    %137 = vmatprep.subr.mxu0 0.0
    %138 = vmatpush2.msra.mxu0 0.0
    %139 = vmatprep.subr.mxu0 0.0
    %140 = vmatpush2.msra.mxu0 0.0
    %141 = vmatprep.subr.mxu0 0.0
    %142 = vmatpush2.msra.mxu0 0.0
    %143 = vmatprep.subr.mxu0 0.0
    %144 = vmatpush2.msra.mxu0 0.0
    %145 = vmatprep.subr.mxu0 0.0
    %146 = vmatpush2.msra.mxu0 0.0
    %147 = vmatprep.subr.mxu0 0.0
    %148 = vmatpush2.msra.mxu0 0.0
    %149 = vmatprep.subr.mxu0 0.0
    %150 = vmatpush2.msra.mxu0 0.0
    %151 = vmatprep.subr.mxu0 0.0
    %152 = vmatpush2.msra.mxu0 0.0
    %153 = vmatprep.subr.mxu0 0.0
    %154 = vmatpush2.msra.mxu0 0.0
    %155 = vmatprep.subr.mxu0 0.0
    %156 = vmatpush2.msra.mxu0 0.0
    %157 = vmatprep.subr.mxu0 0.0
    %158 = vmatpush2.msra.mxu0 0.0
    %159 = vmatprep.subr.mxu0 0.0
    %160 = vmatpush2.msra.mxu0 0.0
    %161 = vmatprep.subr.mxu0 0.0
    %162 = vmatpush2.msra.mxu0 0.0
    %163 = vmatprep.mubr.f32.mxu0 0.0
    %164 = vmatmul.mubr.f32.gmra.mxu0 %v97
    %v165 = vpop.f32.mrf.mxu0
    %v166 = vadd.f32 0.0, %v165
    %v167 = vpop.f32.mrf.mxu0
    %168 = vdwg.mxu0
    %vm169 = vcmask 130048
    %170 = vst.msk [vmem:[#allocation2] sm:$0xff] %vm169, %v93
    %171 = vst.msk [vmem:[#allocation2 + $0x8] sm:$0xff] %vm169, %v166
    // Predicated region
    $region10: #{matrix_multiply.1} parent=1 // pred_check
      _
    $region11: #{matrix_multiply.1} parent=1 // pred_check_branch
      %173 = sbr.rel (0) target = $region13
    $region12: #{matrix_multiply.1} parent=1 // pred_region
      %s175 = ssub.s32 256, 256
      %176 = vsyncadd [#allocation3], %s175
      %s177 = sshll.u32 [#allocation2], 4
      %s178 = int_to_ptr.vmem [resolvable:$true] %s177
      %183 = dma.vmem_to_hbm [thread:$0]  %s178, 256, %s2, [#allocation3], 128, 128, 8
    $region13: #{matrix_multiply.1} parent=1 // pred_fallthru
      _
    // Predicated region
    $region14: #{matrix_multiply.1} parent=1 // pred_check
      _
    $region15: #{matrix_multiply.1} parent=1 // pred_check_branch
      %185 = sbr.rel (0) target = $region17
    $region16: #{matrix_multiply.1} parent=1 // pred_region
      %186 = dma.done [#allocation3], 256
    $region17: #{matrix_multiply.1} parent=1 // pred_fallthru
      _
    %187 = vsyncpa [#allocation3], 1

</llo_original>
